<compile_context>
chip_gen: v7x
topology: tpu7x:2x2x1
jax: 0.10.0
libtpu: 0.0.40
codegen_flags: <defaults>
</compile_context>

<pallas_src>
from collections import Counter

import numpy as np
import jax
import jax.numpy as jnp
from jax.experimental import pallas as pl
from jax.experimental.pallas import tpu as pltpu


# The 8 fixed 3x3 gradient kernels from GLoss.__init__ (kernel 3 duplicates
# kernel 0, exactly as in the original module).
KERNELS = [
    [[-1, 0, 0], [0, 1, 0], [0, 0, 0]],
    [[0, -1, 0], [0, 1, 0], [0, 0, 0]],
    [[0, 0, -1], [0, 1, 0], [0, 0, 0]],
    [[-1, 0, 0], [0, 1, 0], [0, 0, 0]],
    [[0, 0, 0], [0, 1, -1], [0, 0, 0]],
    [[0, 0, 0], [0, 1, 0], [-1, 0, 0]],
    [[0, 0, 0], [0, 1, 0], [0, -1, 0]],
    [[0, 0, 0], [0, 1, 0], [0, 0, -1]],
]


def _neighbour_offsets(kernels):
    offs = []
    for k in kernels:
        taps = [(r - 1, c - 1) for r in range(3) for c in range(3)
                if k[r][c] == -1]
        assert len(taps) == 1 and k[1][1] == 1
        offs.append(taps[0])
    return tuple(offs)


_OFFSETS = _neighbour_offsets(KERNELS)    # 8 neighbour offsets (incl. duplicate)


def _paired_dirs(offsets):
    """Collapse opposite offsets: for the plane-global sum,
    sum_p mask_o[p]*|d[p]-d[p+o]| is identical for o and -o, so only one
    representative per {o, -o} pair is kept with the combined multiplicity."""
    cnt = Counter(offsets)
    dirs = []
    for (dr, dc), mult in sorted(cnt.items()):
        neg = (-dr, -dc)
        if neg in cnt and neg < (dr, dc):
            continue                       # already counted with its opposite
        dirs.append(((dr, dc), mult + (cnt[neg] if neg in cnt else 0)))
    return tuple(dirs)


_DIRS4 = _paired_dirs(_OFFSETS)            # 4 directions, multiplicities 3,2,2,1
assert sum(m for _, m in _DIRS4) == len(_OFFSETS)


# ---------------------------------------------------------------------------
# Per-lane constant weights (numpy, baked as constants at trace time)
# ---------------------------------------------------------------------------
def _inplane_mask(dr, dc, row, col, h, w):
    """1.0 where the (row+dr, col+dc) neighbour lies inside its own plane."""
    msk = np.ones(row.shape, dtype=np.float32)
    if dr == -1:
        msk *= (row >= 1).astype(np.float32)
    elif dr == 1:
        msk *= (row <= h - 2).astype(np.float32)
    if dc == -1:
        msk *= (col >= 1).astype(np.float32)
    elif dc == 1:
        msk *= (col <= w - 2).astype(np.float32)
    return msk


def _make_weights(h, w, l, m, pix_w, grad_w):
    """4 direction weights (grad_w * paired multiplicity * interior mask) and
    one |d| weight (pixel-L1 + grad_w * padding-halo count of all 8 kernels),
    each (1, m) f32, plus the 4 lane-roll shifts."""
    u = np.arange(m, dtype=np.int64) % l       # in-plane flat position per lane
    row, col = u // w, u % w
    wdirs, shifts = [], []
    for (dr, dc), mult in _DIRS4:
        wdirs.append((grad_w * mult * _inplane_mask(dr, dc, row, col, h, w))
                     .astype(np.float32).reshape(1, m))
        shifts.append((-(dr * w + dc)) % m)
    halo = np.zeros(m, dtype=np.float32)
    for dr, dc in _OFFSETS:                    # all 8 kernels, incl. duplicate
        halo += 1.0 - _inplane_mask(dr, dc, row, col, h, w)
    wabs = (pix_w + grad_w * halo).astype(np.float32).reshape(1, m)
    return wdirs, wabs, shifts


# ---------------------------------------------------------------------------
# Pallas kernel
# ---------------------------------------------------------------------------
def _make_gloss_kernel(n_rows, tn, m, shifts, needs_row_mask, fused_diff):
    """Kernel over (tn, m) blocks of lane-packed planes.

    fused_diff=True : refs = (wd0..wd3, wabs, sr, hr, out, d_out); computes
                      d = sr - hr (f32), writes it out, accumulates the loss.
    fused_diff=False: refs = (wd0..wd3, wabs, d, out); loss only.
    Emits one (1, 1, 128) partial-sum block per grid step:
        sum_lane [ sum_dir wd_dir(lane)*|d - roll_dir(d)| + wabs(lane)*|d| ]
    """
    def kernel(*refs):
        if fused_diff:
            wd0, wd1, wd2, wd3, wabs_ref, sr_ref, hr_ref, out_ref, d_out_ref = refs
            d = sr_ref[...].astype(jnp.float32) - hr_ref[...].astype(jnp.float32)
        else:
            wd0, wd1, wd2, wd3, wabs_ref, d_in_ref, out_ref = refs
            d = d_in_ref[...].astype(jnp.float32)

        if needs_row_mask:                       # zero Pallas' padding rows
            rid = (jax.lax.broadcasted_iota(jnp.int32, (tn, 1), 0)
                   + pl.program_id(0) * tn)
            d = d * (rid < n_rows).astype(jnp.float32)

        if fused_diff:
            d_out_ref[...] = d

        contrib = wabs_ref[...] * jnp.abs(d)     # pixel L1 + padding-halo terms
        for w_ref, shift in zip((wd0, wd1, wd2, wd3), shifts):
            nb = pltpu.roll(d, shift, axis=1)    # nb[u] = d[(u + off) mod m]
            contrib = contrib + w_ref[...] * jnp.abs(d - nb)

        out_ref[...] = jnp.full((1, 1, 128), jnp.sum(contrib), jnp.float32)

    return kernel


# ---------------------------------------------------------------------------
# Wrapper helpers
# ---------------------------------------------------------------------------
def _pack_planes(n, l):
    """Lane-packing factor G (dividing n): prefer the smallest G with G*l a
    multiple of 128 (clean full-width lane ops), else the smallest with
    G*l >= 128, else n.  The packing reshape of contiguous planes is free."""
    fallback = None
    for g in range(1, n + 1):
        if n % g:
            continue
        m = g * l
        if m % 128 == 0 and m <= (1 << 16):
            return g
        if fallback is None and m >= 128:
            fallback = g
    return fallback if fallback is not None else n


def _choose_rows_per_block(rows, m, stream_bytes_per_row):
    """Block row count from a VMEM model: double-buffered streamed blocks plus
    ~3 full-size (tn, m) f32 in-kernel temporaries, ~20 MiB total (fits v7x's
    scoped VMEM with margin; vmem_limit_bytes is raised to 32 MiB for v5e).
    Prefers a divisor of `rows` (no remainder mask) and keeps >= 2 grid steps
    when possible so dimension_semantics=('parallel',) can use both v7x TCs."""
    budget = max((20 << 20) - 5 * 8 * 4 * m, 4 << 20)   # minus resident weights
    per_row = stream_bytes_per_row + 3 * 4 * m
    cap = min((budget // per_row) // 8 * 8, 512)
    # TODO(synk): planes so large that even an 8-row block exceeds the budget
    # would need lane-dim tiling with halos (not needed for typical SR patches).
    cap = max(cap, 8)
    if rows >= 16:
        cap = min(cap, ((rows + 1) // 2 + 7) // 8 * 8)  # >= 2 grid steps (v7x)
    if rows <= cap:
        return rows                                     # one full-extent block
    for tn in range(cap, 7, -8):                        # prefer exact divisor
        if rows % tn == 0:
            return tn
    return cap


def _run_pass(h, w, pix_w, grad_w, sr_planes, hr_planes=None):
    """One pallas_call pass over lane-packed planes of shape (n, h*w).

    With hr_planes given (full-res pass): returns (loss_sum, d_planes) where
    d_planes = sr - hr in f32, shape (n, h*w).  Without: sr_planes already
    holds d and only the loss sum is returned.
    """
    fused_diff = hr_planes is not None
    n, l = sr_planes.shape
    g = _pack_planes(n, l)
    m, rows = g * l, n // g
    srp = sr_planes.reshape(rows, m)          # free: g consecutive planes / row

    wdirs, wabs, shifts = _make_weights(h, w, l, m, pix_w, grad_w)

    itemsize = sr_planes.dtype.itemsize
    stream = 2 * itemsize * m                 # sr (or d) input, double-buffered
    if fused_diff:
        stream += 2 * itemsize * m + 2 * 4 * m    # hr input + emitted d output
    tn = _choose_rows_per_block(rows, m, stream)
    nblk = pl.cdiv(rows, tn)
    needs_row_mask = (rows % tn) != 0

    kernel = _make_gloss_kernel(rows, tn, m, shifts, needs_row_mask, fused_diff)

    in_specs = [pl.BlockSpec((1, m), lambda i: (0, 0)) for _ in range(5)]
    in_specs.append(pl.BlockSpec((tn, m), lambda i: (i, 0)))
    args = list(wdirs) + [wabs, srp]

    if fused_diff:
        in_specs.append(pl.BlockSpec((tn, m), lambda i: (i, 0)))
        args.append(hr_planes.reshape(rows, m))
        out_shape = (jax.ShapeDtypeStruct((nblk, 1, 128), jnp.float32),
                     jax.ShapeDtypeStruct((rows, m), jnp.float32))
        out_specs = [pl.BlockSpec((1, 1, 128), lambda i: (i, 0, 0)),
                     pl.BlockSpec((tn, m), lambda i: (i, 0))]
    else:
        out_shape = jax.ShapeDtypeStruct((nblk, 1, 128), jnp.float32)
        out_specs = pl.BlockSpec((1, 1, 128), lambda i: (i, 0, 0))

    result = pl.pallas_call(
        kernel,
        out_shape=out_shape,
        grid_spec=pltpu.PrefetchScalarGridSpec(
            num_scalar_prefetch=0,
            grid=(nblk,),
            in_specs=in_specs,
            out_specs=out_specs,
        ),
        compiler_params=pltpu.CompilerParams(
            dimension_semantics=("parallel",),
            vmem_limit_bytes=32 * 1024 * 1024),
    )(*args)

    if fused_diff:
        partials, d = result
        return jnp.sum(partials[:, 0, 0]), d.reshape(n, l)
    return jnp.sum(result[:, 0, 0])


def _split_downsample(x, rate):
    """Exact JAX mirror of GLoss.split_downsample (view/permute/contiguous/view)."""
    b, c, h, w = x.shape
    x = x.reshape(b, c, h // rate, rate, w // rate, rate)
    x = jnp.transpose(x, (0, 1, 2, 4, 3, 5))
    return x.reshape(b, c * rate * rate, h // rate, w // rate)


def gloss(sr, hr, scale_factor=4):
    """Forward pass of GLoss.  sr, hr: (B, C, H, W).  Returns scalar f32."""
    b, c, h, w = sr.shape
    rates = {2: (2,), 3: (2, 3)}.get(scale_factor, (2, 4))
    n_pix = b * c * h * w

    # Fused pass: pixel L1 + full-resolution gradient L1, emitting d = sr - hr
    # so the split-downsampled passes never re-read (or re-transpose) sr / hr.
    total, d = _run_pass(h, w, 1.0 / n_pix, 1.0 / (8 * n_pix),
                         sr.reshape(b * c, h * w), hr.reshape(b * c, h * w))
    d = d.reshape(b, c, h, w)

    # Split-downsampled gradient terms (same kernel, single d input).  NOTE:
    # split_downsample permutes spatial dims BEFORE phase dims (NOT a standard
    # pixel-unshuffle), so the relayout (PyTorch's .contiguous()) stays as a
    # wrapper transpose; by linearity of the layout op it acts on d directly.
    for r in rates:
        dd = _split_downsample(d, r)
        hr_, wr_ = h // r, w // r
        total = total + _run_pass(hr_, wr_, 0.0, 1.0 / (8 * n_pix * r * r),
                                  dd.reshape(-1, hr_ * wr_))
    return total


# ---------------------------------------------------------------------------
# Pure-JAX reference (mirrors the PyTorch module)
# ---------------------------------------------------------------------------
def _ref_extract_gradients(x):
    """(B, C, H, W) -> (B, 8*C, H, W).  Channel order differs from the module
    (kernel-major vs channel-major) which is irrelevant for the L1 mean."""
    h, w = x.shape[-2:]
    xp = jnp.pad(x, ((0, 0), (0, 0), (1, 1), (1, 1)))
    outs = []
    for dr, dc in _OFFSETS:
        nb = xp[:, :, 1 + dr:1 + dr + h, 1 + dc:1 + dc + w]
        outs.append(x - nb)
    return jnp.concatenate(outs, axis=1)


def _ref_gloss(sr, hr, scale_factor=4):
    sr = sr.astype(jnp.float32)
    hr = hr.astype(jnp.float32)
    rates = {2: (2,), 3: (2, 3)}.get(scale_factor, (2, 4))
    total = jnp.mean(jnp.abs(sr - hr))
    total = total + jnp.mean(jnp.abs(_ref_extract_gradients(sr)
                                     - _ref_extract_gradients(hr)))
    for r in rates:
        srd = _split_downsample(sr, r)
        hrd = _split_downsample(hr, r)
        total = total + jnp.mean(jnp.abs(_ref_extract_gradients(srd)
                                         - _ref_extract_gradients(hrd))) / (r * r)
    return total


if __name__ == "__main__":
    key = jax.random.PRNGKey(0)
    k1, k2 = jax.random.split(key)
    B, C, H, W = 2, 4, 16, 16              # H, W divisible by all sampling rates
    sr = jax.random.uniform(k1, (B, C, H, W), dtype=jnp.float32)
    hr = jax.random.uniform(k2, (B, C, H, W), dtype=jnp.float32)

    gloss_fn = jax.jit(gloss, static_argnames=("scale_factor",))
    out = jax.block_until_ready(gloss_fn(sr, hr, scale_factor=4))
    ref = jax.block_until_ready(_ref_gloss(sr, hr, scale_factor=4))

    assert abs(float(out) - float(ref)) <= 1e-4 * max(1.0, abs(float(ref))), (
        float(out), float(ref))
    print("KERNEL_OK")
</pallas_src>

<mosaic_0001>
module attributes {stable_mosaic.version = 11 : i64} {
  func.func @kernel(%arg0: i32, %arg1: memref<1x256xf32, #tpu.memory_space<vmem>>, %arg2: memref<1x256xf32, #tpu.memory_space<vmem>>, %arg3: memref<1x256xf32, #tpu.memory_space<vmem>>, %arg4: memref<1x256xf32, #tpu.memory_space<vmem>>, %arg5: memref<1x256xf32, #tpu.memory_space<vmem>>, %arg6: memref<8x256xf32, #tpu.memory_space<vmem>>, %arg7: memref<8x256xf32, #tpu.memory_space<vmem>>, %arg8: memref<1x1x128xf32, #tpu.memory_space<vmem>>, %arg9: memref<8x256xf32, #tpu.memory_space<vmem>>) attributes {dimension_semantics = [#tpu.dimension_semantics<parallel>], iteration_bounds = array<i64: 1>, scalar_prefetch = 0 : i64, scratch_operands = 0 : i64, tpu.core_type = #tpu.core_type<tc>, window_params = [{pipeline_mode = #tpu.pipeline_mode<synchronous>, transform_indices = @transform_0, window_bounds = array<i64: 1, 256>}, {pipeline_mode = #tpu.pipeline_mode<synchronous>, transform_indices = @transform_1, window_bounds = array<i64: 1, 256>}, {pipeline_mode = #tpu.pipeline_mode<synchronous>, transform_indices = @transform_2, window_bounds = array<i64: 1, 256>}, {pipeline_mode = #tpu.pipeline_mode<synchronous>, transform_indices = @transform_3, window_bounds = array<i64: 1, 256>}, {pipeline_mode = #tpu.pipeline_mode<synchronous>, transform_indices = @transform_4, window_bounds = array<i64: 1, 256>}, {transform_indices = @transform_5, window_bounds = array<i64: 8, 256>}, {transform_indices = @transform_6, window_bounds = array<i64: 8, 256>}, {transform_indices = @transform_7, window_bounds = array<i64: 1, 1, 128>}, {transform_indices = @transform_8, window_bounds = array<i64: 8, 256>}]} {
    %c0 = arith.constant 0 : index
    %c0_0 = arith.constant 0 : index
    %0 = vector.load %arg6[%c0, %c0_0] : memref<8x256xf32, #tpu.memory_space<vmem>>, vector<8x256xf32>
    %c0_1 = arith.constant 0 : index
    %c0_2 = arith.constant 0 : index
    %1 = vector.load %arg7[%c0_1, %c0_2] : memref<8x256xf32, #tpu.memory_space<vmem>>, vector<8x256xf32>
    %2 = arith.subf %0, %1 : vector<8x256xf32>
    %c0_3 = arith.constant 0 : index
    %c0_4 = arith.constant 0 : index
    %3 = vector.load %arg9[%c0_3, %c0_4] : memref<8x256xf32, #tpu.memory_space<vmem>>, vector<8x256xf32>
    tpu.vector_store %arg9[%c0_3, %c0_4], %2 {strides = array<i32>} : memref<8x256xf32, #tpu.memory_space<vmem>>, vector<8x256xf32>,
    %c0_5 = arith.constant 0 : index
    %c0_6 = arith.constant 0 : index
    %4 = vector.load %arg5[%c0_5, %c0_6] : memref<1x256xf32, #tpu.memory_space<vmem>>, vector<1x256xf32>
    %5 = math.absf %2 : vector<8x256xf32>
    %6 = vector.broadcast %4 : vector<1x256xf32> to vector<8x256xf32>
    %7 = arith.mulf %6, %5 : vector<8x256xf32>
    %c17_i32 = arith.constant 17 : i32
    %8 = tpu.dynamic_rotate %2 by %c17_i32 dim 1 : vector<8x256xf32>, i32 -> vector<8x256xf32>
    %c0_7 = arith.constant 0 : index
    %c0_8 = arith.constant 0 : index
    %9 = vector.load %arg1[%c0_7, %c0_8] : memref<1x256xf32, #tpu.memory_space<vmem>>, vector<1x256xf32>
    %10 = arith.subf %2, %8 : vector<8x256xf32>
    %11 = math.absf %10 : vector<8x256xf32>
    %12 = vector.broadcast %9 : vector<1x256xf32> to vector<8x256xf32>
    %13 = arith.mulf %12, %11 : vector<8x256xf32>
    %14 = arith.addf %7, %13 : vector<8x256xf32>
    %c16_i32 = arith.constant 16 : i32
    %15 = tpu.dynamic_rotate %2 by %c16_i32 dim 1 : vector<8x256xf32>, i32 -> vector<8x256xf32>
    %c0_9 = arith.constant 0 : index
    %c0_10 = arith.constant 0 : index
    %16 = vector.load %arg2[%c0_9, %c0_10] : memref<1x256xf32, #tpu.memory_space<vmem>>, vector<1x256xf32>
    %17 = arith.subf %2, %15 : vector<8x256xf32>
    %18 = math.absf %17 : vector<8x256xf32>
    %19 = vector.broadcast %16 : vector<1x256xf32> to vector<8x256xf32>
    %20 = arith.mulf %19, %18 : vector<8x256xf32>
    %21 = arith.addf %14, %20 : vector<8x256xf32>
    %c15_i32 = arith.constant 15 : i32
    %22 = tpu.dynamic_rotate %2 by %c15_i32 dim 1 : vector<8x256xf32>, i32 -> vector<8x256xf32>
    %c0_11 = arith.constant 0 : index
    %c0_12 = arith.constant 0 : index
    %23 = vector.load %arg3[%c0_11, %c0_12] : memref<1x256xf32, #tpu.memory_space<vmem>>, vector<1x256xf32>
    %24 = arith.subf %2, %22 : vector<8x256xf32>
    %25 = math.absf %24 : vector<8x256xf32>
    %26 = vector.broadcast %23 : vector<1x256xf32> to vector<8x256xf32>
    %27 = arith.mulf %26, %25 : vector<8x256xf32>
    %28 = arith.addf %21, %27 : vector<8x256xf32>
    %c255_i32 = arith.constant 255 : i32
    %29 = tpu.dynamic_rotate %2 by %c255_i32 dim 1 : vector<8x256xf32>, i32 -> vector<8x256xf32>
    %c0_13 = arith.constant 0 : index
    %c0_14 = arith.constant 0 : index
    %30 = vector.load %arg4[%c0_13, %c0_14] : memref<1x256xf32, #tpu.memory_space<vmem>>, vector<1x256xf32>
    %31 = arith.subf %2, %29 : vector<8x256xf32>
    %32 = math.absf %31 : vector<8x256xf32>
    %33 = vector.broadcast %30 : vector<1x256xf32> to vector<8x256xf32>
    %34 = arith.mulf %33, %32 : vector<8x256xf32>
    %35 = arith.addf %28, %34 : vector<8x256xf32>
    %36 = vector.shape_cast %35 : vector<8x256xf32> to vector<1x8x256xf32>
    %cst = arith.constant dense<0.000000e+00> : vector<1xf32>
    %37 = vector.multi_reduction <add>, %36, %cst [1, 2] : vector<1x8x256xf32> to vector<1xf32>
    %38 = vector.shape_cast %37 : vector<1xf32> to vector<1x1x1xf32>
    %39 = vector.extract %38[0, 0, 0] : f32 from vector<1x1x1xf32>
    %40 = vector.broadcast %39 : f32 to vector<1x1x128xf32>
    %c0_15 = arith.constant 0 : index
    %c0_16 = arith.constant 0 : index
    %c0_17 = arith.constant 0 : index
    %41 = vector.load %arg8[%c0_15, %c0_16, %c0_17] : memref<1x1x128xf32, #tpu.memory_space<vmem>>, vector<1x1x128xf32>
    tpu.vector_store %arg8[%c0_15, %c0_16, %c0_17], %40 {strides = array<i32>} : memref<1x1x128xf32, #tpu.memory_space<vmem>>, vector<1x1x128xf32>,
    return
  }
  func.func @transform_0(%arg0: i32) -> (i32, i32) {
    %c0_i32 = arith.constant 0 : i32
    %c0_i32_0 = arith.constant 0 : i32
    %c0_i32_1 = arith.constant 0 : i32
    return %c0_i32, %c0_i32_0 : i32, i32
  }
  func.func @transform_1(%arg0: i32) -> (i32, i32) {
    %c0_i32 = arith.constant 0 : i32
    %c0_i32_0 = arith.constant 0 : i32
    %c0_i32_1 = arith.constant 0 : i32
    return %c0_i32, %c0_i32_0 : i32, i32
  }
  func.func @transform_2(%arg0: i32) -> (i32, i32) {
    %c0_i32 = arith.constant 0 : i32
    %c0_i32_0 = arith.constant 0 : i32
    %c0_i32_1 = arith.constant 0 : i32
    return %c0_i32, %c0_i32_0 : i32, i32
  }
  func.func @transform_3(%arg0: i32) -> (i32, i32) {
    %c0_i32 = arith.constant 0 : i32
    %c0_i32_0 = arith.constant 0 : i32
    %c0_i32_1 = arith.constant 0 : i32
    return %c0_i32, %c0_i32_0 : i32, i32
  }
  func.func @transform_4(%arg0: i32) -> (i32, i32) {
    %c0_i32 = arith.constant 0 : i32
    %c0_i32_0 = arith.constant 0 : i32
    %c0_i32_1 = arith.constant 0 : i32
    return %c0_i32, %c0_i32_0 : i32, i32
  }
  func.func @transform_5(%arg0: i32) -> (i32, i32) {
    %c0_i32 = arith.constant 0 : i32
    %c0_i32_0 = arith.constant 0 : i32
    return %arg0, %c0_i32 : i32, i32
  }
  func.func @transform_6(%arg0: i32) -> (i32, i32) {
    %c0_i32 = arith.constant 0 : i32
    %c0_i32_0 = arith.constant 0 : i32
    return %arg0, %c0_i32 : i32, i32
  }
  func.func @transform_7(%arg0: i32) -> (i32, i32, i32) {
    %c0_i32 = arith.constant 0 : i32
    %c0_i32_0 = arith.constant 0 : i32
    %c0_i32_1 = arith.constant 0 : i32
    return %arg0, %c0_i32, %c0_i32_0 : i32, i32, i32
  }
  func.func @transform_8(%arg0: i32) -> (i32, i32) {
    %c0_i32 = arith.constant 0 : i32
    %c0_i32_0 = arith.constant 0 : i32
    return %arg0, %c0_i32 : i32, i32
  }
}

module attributes {stable_mosaic.version = 11 : i64} {
  func.func @kernel(%arg0: i32, %arg1: memref<1x128xf32, #tpu.memory_space<vmem>>, %arg2: memref<1x128xf32, #tpu.memory_space<vmem>>, %arg3: memref<1x128xf32, #tpu.memory_space<vmem>>, %arg4: memref<1x128xf32, #tpu.memory_space<vmem>>, %arg5: memref<1x128xf32, #tpu.memory_space<vmem>>, %arg6: memref<8x128xf32, #tpu.memory_space<vmem>>, %arg7: memref<1x1x128xf32, #tpu.memory_space<vmem>>) attributes {dimension_semantics = [#tpu.dimension_semantics<parallel>], iteration_bounds = array<i64: 2>, scalar_prefetch = 0 : i64, scratch_operands = 0 : i64, tpu.core_type = #tpu.core_type<tc>, window_params = [{pipeline_mode = #tpu.pipeline_mode<synchronous>, transform_indices = @transform_0, window_bounds = array<i64: 1, 128>}, {pipeline_mode = #tpu.pipeline_mode<synchronous>, transform_indices = @transform_1, window_bounds = array<i64: 1, 128>}, {pipeline_mode = #tpu.pipeline_mode<synchronous>, transform_indices = @transform_2, window_bounds = array<i64: 1, 128>}, {pipeline_mode = #tpu.pipeline_mode<synchronous>, transform_indices = @transform_3, window_bounds = array<i64: 1, 128>}, {pipeline_mode = #tpu.pipeline_mode<synchronous>, transform_indices = @transform_4, window_bounds = array<i64: 1, 128>}, {transform_indices = @transform_5, window_bounds = array<i64: 8, 128>}, {transform_indices = @transform_6, window_bounds = array<i64: 1, 1, 128>}]} {
    %c0 = arith.constant 0 : index
    %c0_0 = arith.constant 0 : index
    %0 = vector.load %arg6[%c0, %c0_0] : memref<8x128xf32, #tpu.memory_space<vmem>>, vector<8x128xf32>
    %c0_1 = arith.constant 0 : index
    %c0_2 = arith.constant 0 : index
    %1 = vector.load %arg5[%c0_1, %c0_2] : memref<1x128xf32, #tpu.memory_space<vmem>>, vector<1x128xf32>
    %2 = math.absf %0 : vector<8x128xf32>
    %3 = vector.broadcast %1 : vector<1x128xf32> to vector<8x128xf32>
    %4 = arith.mulf %3, %2 : vector<8x128xf32>
    %c5_i32 = arith.constant 5 : i32
    %5 = tpu.dynamic_rotate %0 by %c5_i32 dim 1 : vector<8x128xf32>, i32 -> vector<8x128xf32>
    %c0_3 = arith.constant 0 : index
    %c0_4 = arith.constant 0 : index
    %6 = vector.load %arg1[%c0_3, %c0_4] : memref<1x128xf32, #tpu.memory_space<vmem>>, vector<1x128xf32>
    %7 = arith.subf %0, %5 : vector<8x128xf32>
    %8 = math.absf %7 : vector<8x128xf32>
    %9 = vector.broadcast %6 : vector<1x128xf32> to vector<8x128xf32>
    %10 = arith.mulf %9, %8 : vector<8x128xf32>
    %11 = arith.addf %4, %10 : vector<8x128xf32>
    %c4_i32 = arith.constant 4 : i32
    %12 = tpu.dynamic_rotate %0 by %c4_i32 dim 1 : vector<8x128xf32>, i32 -> vector<8x128xf32>
    %c0_5 = arith.constant 0 : index
    %c0_6 = arith.constant 0 : index
    %13 = vector.load %arg2[%c0_5, %c0_6] : memref<1x128xf32, #tpu.memory_space<vmem>>, vector<1x128xf32>
    %14 = arith.subf %0, %12 : vector<8x128xf32>
    %15 = math.absf %14 : vector<8x128xf32>
    %16 = vector.broadcast %13 : vector<1x128xf32> to vector<8x128xf32>
    %17 = arith.mulf %16, %15 : vector<8x128xf32>
    %18 = arith.addf %11, %17 : vector<8x128xf32>
    %c3_i32 = arith.constant 3 : i32
    %19 = tpu.dynamic_rotate %0 by %c3_i32 dim 1 : vector<8x128xf32>, i32 -> vector<8x128xf32>
    %c0_7 = arith.constant 0 : index
    %c0_8 = arith.constant 0 : index
    %20 = vector.load %arg3[%c0_7, %c0_8] : memref<1x128xf32, #tpu.memory_space<vmem>>, vector<1x128xf32>
    %21 = arith.subf %0, %19 : vector<8x128xf32>
    %22 = math.absf %21 : vector<8x128xf32>
    %23 = vector.broadcast %20 : vector<1x128xf32> to vector<8x128xf32>
    %24 = arith.mulf %23, %22 : vector<8x128xf32>
    %25 = arith.addf %18, %24 : vector<8x128xf32>
    %c127_i32 = arith.constant 127 : i32
    %26 = tpu.dynamic_rotate %0 by %c127_i32 dim 1 : vector<8x128xf32>, i32 -> vector<8x128xf32>
    %c0_9 = arith.constant 0 : index
    %c0_10 = arith.constant 0 : index
    %27 = vector.load %arg4[%c0_9, %c0_10] : memref<1x128xf32, #tpu.memory_space<vmem>>, vector<1x128xf32>
    %28 = arith.subf %0, %26 : vector<8x128xf32>
    %29 = math.absf %28 : vector<8x128xf32>
    %30 = vector.broadcast %27 : vector<1x128xf32> to vector<8x128xf32>
    %31 = arith.mulf %30, %29 : vector<8x128xf32>
    %32 = arith.addf %25, %31 : vector<8x128xf32>
    %33 = vector.shape_cast %32 : vector<8x128xf32> to vector<1x8x128xf32>
    %cst = arith.constant dense<0.000000e+00> : vector<1xf32>
    %34 = vector.multi_reduction <add>, %33, %cst [1, 2] : vector<1x8x128xf32> to vector<1xf32>
    %35 = vector.shape_cast %34 : vector<1xf32> to vector<1x1x1xf32>
    %36 = vector.extract %35[0, 0, 0] : f32 from vector<1x1x1xf32>
    %37 = vector.broadcast %36 : f32 to vector<1x1x128xf32>
    %c0_11 = arith.constant 0 : index
    %c0_12 = arith.constant 0 : index
    %c0_13 = arith.constant 0 : index
    %38 = vector.load %arg7[%c0_11, %c0_12, %c0_13] : memref<1x1x128xf32, #tpu.memory_space<vmem>>, vector<1x1x128xf32>
    tpu.vector_store %arg7[%c0_11, %c0_12, %c0_13], %37 {strides = array<i32>} : memref<1x1x128xf32, #tpu.memory_space<vmem>>, vector<1x1x128xf32>,
    return
  }
  func.func @transform_0(%arg0: i32) -> (i32, i32) {
    %c0_i32 = arith.constant 0 : i32
    %c0_i32_0 = arith.constant 0 : i32
    %c0_i32_1 = arith.constant 0 : i32
    return %c0_i32, %c0_i32_0 : i32, i32
  }
  func.func @transform_1(%arg0: i32) -> (i32, i32) {
    %c0_i32 = arith.constant 0 : i32
    %c0_i32_0 = arith.constant 0 : i32
    %c0_i32_1 = arith.constant 0 : i32
    return %c0_i32, %c0_i32_0 : i32, i32
  }
  func.func @transform_2(%arg0: i32) -> (i32, i32) {
    %c0_i32 = arith.constant 0 : i32
    %c0_i32_0 = arith.constant 0 : i32
    %c0_i32_1 = arith.constant 0 : i32
    return %c0_i32, %c0_i32_0 : i32, i32
  }
  func.func @transform_3(%arg0: i32) -> (i32, i32) {
    %c0_i32 = arith.constant 0 : i32
    %c0_i32_0 = arith.constant 0 : i32
    %c0_i32_1 = arith.constant 0 : i32
    return %c0_i32, %c0_i32_0 : i32, i32
  }
  func.func @transform_4(%arg0: i32) -> (i32, i32) {
    %c0_i32 = arith.constant 0 : i32
    %c0_i32_0 = arith.constant 0 : i32
    %c0_i32_1 = arith.constant 0 : i32
    return %c0_i32, %c0_i32_0 : i32, i32
  }
  func.func @transform_5(%arg0: i32) -> (i32, i32) {
    %c0_i32 = arith.constant 0 : i32
    %c0_i32_0 = arith.constant 0 : i32
    return %arg0, %c0_i32 : i32, i32
  }
  func.func @transform_6(%arg0: i32) -> (i32, i32, i32) {
    %c0_i32 = arith.constant 0 : i32
    %c0_i32_0 = arith.constant 0 : i32
    %c0_i32_1 = arith.constant 0 : i32
    return %arg0, %c0_i32, %c0_i32_0 : i32, i32, i32
  }
}

module attributes {stable_mosaic.version = 11 : i64} {
  func.func @kernel(%arg0: i32, %arg1: memref<1x128xf32, #tpu.memory_space<vmem>>, %arg2: memref<1x128xf32, #tpu.memory_space<vmem>>, %arg3: memref<1x128xf32, #tpu.memory_space<vmem>>, %arg4: memref<1x128xf32, #tpu.memory_space<vmem>>, %arg5: memref<1x128xf32, #tpu.memory_space<vmem>>, %arg6: memref<8x128xf32, #tpu.memory_space<vmem>>, %arg7: memref<1x1x128xf32, #tpu.memory_space<vmem>>) attributes {dimension_semantics = [#tpu.dimension_semantics<parallel>], iteration_bounds = array<i64: 2>, scalar_prefetch = 0 : i64, scratch_operands = 0 : i64, tpu.core_type = #tpu.core_type<tc>, window_params = [{pipeline_mode = #tpu.pipeline_mode<synchronous>, transform_indices = @transform_0, window_bounds = array<i64: 1, 128>}, {pipeline_mode = #tpu.pipeline_mode<synchronous>, transform_indices = @transform_1, window_bounds = array<i64: 1, 128>}, {pipeline_mode = #tpu.pipeline_mode<synchronous>, transform_indices = @transform_2, window_bounds = array<i64: 1, 128>}, {pipeline_mode = #tpu.pipeline_mode<synchronous>, transform_indices = @transform_3, window_bounds = array<i64: 1, 128>}, {pipeline_mode = #tpu.pipeline_mode<synchronous>, transform_indices = @transform_4, window_bounds = array<i64: 1, 128>}, {transform_indices = @transform_5, window_bounds = array<i64: 8, 128>}, {transform_indices = @transform_6, window_bounds = array<i64: 1, 1, 128>}]} {
    %c0 = arith.constant 0 : index
    %c0_0 = arith.constant 0 : index
    %0 = vector.load %arg6[%c0, %c0_0] : memref<8x128xf32, #tpu.memory_space<vmem>>, vector<8x128xf32>
    %c0_1 = arith.constant 0 : index
    %c0_2 = arith.constant 0 : index
    %1 = vector.load %arg5[%c0_1, %c0_2] : memref<1x128xf32, #tpu.memory_space<vmem>>, vector<1x128xf32>
    %2 = math.absf %0 : vector<8x128xf32>
    %3 = vector.broadcast %1 : vector<1x128xf32> to vector<8x128xf32>
    %4 = arith.mulf %3, %2 : vector<8x128xf32>
    %c9_i32 = arith.constant 9 : i32
    %5 = tpu.dynamic_rotate %0 by %c9_i32 dim 1 : vector<8x128xf32>, i32 -> vector<8x128xf32>
    %c0_3 = arith.constant 0 : index
    %c0_4 = arith.constant 0 : index
    %6 = vector.load %arg1[%c0_3, %c0_4] : memref<1x128xf32, #tpu.memory_space<vmem>>, vector<1x128xf32>
    %7 = arith.subf %0, %5 : vector<8x128xf32>
    %8 = math.absf %7 : vector<8x128xf32>
    %9 = vector.broadcast %6 : vector<1x128xf32> to vector<8x128xf32>
    %10 = arith.mulf %9, %8 : vector<8x128xf32>
    %11 = arith.addf %4, %10 : vector<8x128xf32>
    %c8_i32 = arith.constant 8 : i32
    %12 = tpu.dynamic_rotate %0 by %c8_i32 dim 1 : vector<8x128xf32>, i32 -> vector<8x128xf32>
    %c0_5 = arith.constant 0 : index
    %c0_6 = arith.constant 0 : index
    %13 = vector.load %arg2[%c0_5, %c0_6] : memref<1x128xf32, #tpu.memory_space<vmem>>, vector<1x128xf32>
    %14 = arith.subf %0, %12 : vector<8x128xf32>
    %15 = math.absf %14 : vector<8x128xf32>
    %16 = vector.broadcast %13 : vector<1x128xf32> to vector<8x128xf32>
    %17 = arith.mulf %16, %15 : vector<8x128xf32>
    %18 = arith.addf %11, %17 : vector<8x128xf32>
    %c7_i32 = arith.constant 7 : i32
    %19 = tpu.dynamic_rotate %0 by %c7_i32 dim 1 : vector<8x128xf32>, i32 -> vector<8x128xf32>
    %c0_7 = arith.constant 0 : index
    %c0_8 = arith.constant 0 : index
    %20 = vector.load %arg3[%c0_7, %c0_8] : memref<1x128xf32, #tpu.memory_space<vmem>>, vector<1x128xf32>
    %21 = arith.subf %0, %19 : vector<8x128xf32>
    %22 = math.absf %21 : vector<8x128xf32>
    %23 = vector.broadcast %20 : vector<1x128xf32> to vector<8x128xf32>
    %24 = arith.mulf %23, %22 : vector<8x128xf32>
    %25 = arith.addf %18, %24 : vector<8x128xf32>
    %c127_i32 = arith.constant 127 : i32
    %26 = tpu.dynamic_rotate %0 by %c127_i32 dim 1 : vector<8x128xf32>, i32 -> vector<8x128xf32>
    %c0_9 = arith.constant 0 : index
    %c0_10 = arith.constant 0 : index
    %27 = vector.load %arg4[%c0_9, %c0_10] : memref<1x128xf32, #tpu.memory_space<vmem>>, vector<1x128xf32>
    %28 = arith.subf %0, %26 : vector<8x128xf32>
    %29 = math.absf %28 : vector<8x128xf32>
    %30 = vector.broadcast %27 : vector<1x128xf32> to vector<8x128xf32>
    %31 = arith.mulf %30, %29 : vector<8x128xf32>
    %32 = arith.addf %25, %31 : vector<8x128xf32>
    %33 = vector.shape_cast %32 : vector<8x128xf32> to vector<1x8x128xf32>
    %cst = arith.constant dense<0.000000e+00> : vector<1xf32>
    %34 = vector.multi_reduction <add>, %33, %cst [1, 2] : vector<1x8x128xf32> to vector<1xf32>
    %35 = vector.shape_cast %34 : vector<1xf32> to vector<1x1x1xf32>
    %36 = vector.extract %35[0, 0, 0] : f32 from vector<1x1x1xf32>
    %37 = vector.broadcast %36 : f32 to vector<1x1x128xf32>
    %c0_11 = arith.constant 0 : index
    %c0_12 = arith.constant 0 : index
    %c0_13 = arith.constant 0 : index
    %38 = vector.load %arg7[%c0_11, %c0_12, %c0_13] : memref<1x1x128xf32, #tpu.memory_space<vmem>>, vector<1x1x128xf32>
    tpu.vector_store %arg7[%c0_11, %c0_12, %c0_13], %37 {strides = array<i32>} : memref<1x1x128xf32, #tpu.memory_space<vmem>>, vector<1x1x128xf32>,
    return
  }
  func.func @transform_0(%arg0: i32) -> (i32, i32) {
    %c0_i32 = arith.constant 0 : i32
    %c0_i32_0 = arith.constant 0 : i32
    %c0_i32_1 = arith.constant 0 : i32
    return %c0_i32, %c0_i32_0 : i32, i32
  }
  func.func @transform_1(%arg0: i32) -> (i32, i32) {
    %c0_i32 = arith.constant 0 : i32
    %c0_i32_0 = arith.constant 0 : i32
    %c0_i32_1 = arith.constant 0 : i32
    return %c0_i32, %c0_i32_0 : i32, i32
  }
  func.func @transform_2(%arg0: i32) -> (i32, i32) {
    %c0_i32 = arith.constant 0 : i32
    %c0_i32_0 = arith.constant 0 : i32
    %c0_i32_1 = arith.constant 0 : i32
    return %c0_i32, %c0_i32_0 : i32, i32
  }
  func.func @transform_3(%arg0: i32) -> (i32, i32) {
    %c0_i32 = arith.constant 0 : i32
    %c0_i32_0 = arith.constant 0 : i32
    %c0_i32_1 = arith.constant 0 : i32
    return %c0_i32, %c0_i32_0 : i32, i32
  }
  func.func @transform_4(%arg0: i32) -> (i32, i32) {
    %c0_i32 = arith.constant 0 : i32
    %c0_i32_0 = arith.constant 0 : i32
    %c0_i32_1 = arith.constant 0 : i32
    return %c0_i32, %c0_i32_0 : i32, i32
  }
  func.func @transform_5(%arg0: i32) -> (i32, i32) {
    %c0_i32 = arith.constant 0 : i32
    %c0_i32_0 = arith.constant 0 : i32
    return %arg0, %c0_i32 : i32, i32
  }
  func.func @transform_6(%arg0: i32) -> (i32, i32, i32) {
    %c0_i32 = arith.constant 0 : i32
    %c0_i32_0 = arith.constant 0 : i32
    %c0_i32_1 = arith.constant 0 : i32
    return %arg0, %c0_i32, %c0_i32_0 : i32, i32, i32
  }
}

</mosaic_0001>

<llo_original>
// kernel: gloss.3
$region0: #{gloss.3}
  #allocation0 [shape = 'u32[]', space=smem, size = 0x4, offset = 0x4, fixed_abs, tag = 'smem constant byte address 0x4 - core index']
  #allocation1 [shape = 'u32[144,128]{1,0:T(1,128)}', space=vmem, size = 0x12000, scoped, tag = 'internal scratch']
  %s0 = inlined_call_operand.vmem [shape: f32[1,256], index: 0, kind: input, shape index: {}]
  %s1 = inlined_call_operand.vmem [shape: f32[1,256], index: 1, kind: input, shape index: {}]
  %s2 = inlined_call_operand.vmem [shape: f32[1,256], index: 2, kind: input, shape index: {}]
  %s3 = inlined_call_operand.vmem [shape: f32[1,256], index: 3, kind: input, shape index: {}]
  %s4 = inlined_call_operand.vmem [shape: f32[1,256], index: 4, kind: input, shape index: {}]
  %s5 = inlined_call_operand.vmem [shape: f32[8,256], index: 5, kind: input, shape index: {}]
  %s6 = inlined_call_operand.vmem [shape: f32[8,256], index: 6, kind: input, shape index: {}]
  %s7 = inlined_call_operand.vmem [shape: f32[1,1,128], index: 7, kind: output, shape index: {0}]
  %s8 = inlined_call_operand.vmem [shape: f32[8,256], index: 8, kind: output, shape index: {1}]
  %9 = xla_tuple %s7, %s8
  %s10 = sld [smem:[#allocation0]]
  $region46: #{gloss.3} parent=0
    _
  %s12 = ssub.s32 1, %s10
  %s13 = scalar_select 0, %s12, %s10
  // Predicated region
  $region2: #{gloss.3} parent=0 // pred_check
    _
  $region3: #{gloss.3} parent=0 // pred_check_branch
    %15 = sbr.rel (0) target = $region5
  $region4: #{gloss.3} parent=0 // pred_region
    _
  $region5: #{gloss.3} parent=0 // pred_fallthru
    _
  // Predicated region
  $region6: #{gloss.3} parent=0 // pred_check
    _
  $region7: #{gloss.3} parent=0 // pred_check_branch
    %17 = sbr.rel (0) target = $region9
  $region8: #{gloss.3} parent=0 // pred_region
    _
  $region9: #{gloss.3} parent=0 // pred_fallthru
    _
  // Predicated region
  $region10: #{gloss.3} parent=0 // pred_check
    _
  $region11: #{gloss.3} parent=0 // pred_check_branch
    %19 = sbr.rel (0) target = $region13
  $region12: #{gloss.3} parent=0 // pred_region
    _
  $region13: #{gloss.3} parent=0 // pred_fallthru
    _
  // Predicated region
  $region14: #{gloss.3} parent=0 // pred_check
    _
  $region15: #{gloss.3} parent=0 // pred_check_branch
    %21 = sbr.rel (0) target = $region17
  $region16: #{gloss.3} parent=0 // pred_region
    _
  $region17: #{gloss.3} parent=0 // pred_fallthru
    _
  // Predicated region
  $region18: #{gloss.3} parent=0 // pred_check
    _
  $region19: #{gloss.3} parent=0 // pred_check_branch
    %23 = sbr.rel (0) target = $region21
  $region20: #{gloss.3} parent=0 // pred_region
    _
  $region21: #{gloss.3} parent=0 // pred_fallthru
    _
  // Predicated region
  $region22: #{gloss.3} parent=0 // pred_check
    _
  $region23: #{gloss.3} parent=0 // pred_check_branch
    %25 = sbr.rel (0) target = $region25
  $region24: #{gloss.3} parent=0 // pred_region
    _
  $region25: #{gloss.3} parent=0 // pred_fallthru
    _
  // Predicated region
  $region26: #{gloss.3} parent=0 // pred_check
    _
  $region27: #{gloss.3} parent=0 // pred_check_branch
    %27 = sbr.rel (0) target = $region29
  $region28: #{gloss.3} parent=0 // pred_region
    _
  $region29: #{gloss.3} parent=0 // pred_fallthru
    _
  %v28 = vld [vmem:[%s5] sm:$0xff]
  %v29 = vld [vmem:[%s5 + $0x8] sm:$0xff]
  %v30 = vld [vmem:[%s6] sm:$0xff]
  %v31 = vld [vmem:[%s6 + $0x8] sm:$0xff]
  %v32 = vsub.f32 %v28, %v30
  %v33 = vsub.f32 %v29, %v31
  %34 = vst [vmem:[%s8] sm:$0xff] %v32
  %35 = vst [vmem:[%s8 + $0x8] sm:$0xff] %v33
  %v36 = vld [vmem:[%s4] sm:$0x3]
  %v37 = vand.u32 2147483647, %v32
  %v38 = vand.u32 2147483647, %v33
  %v40 = vlaneseq
  %v41 = vshrl.u32 %v40, 7
  %v42 = vsub.s32 0, %v41
  %v43 = vrot.slane %v36, %v42
  %v44 = vlaneseq
  %v45 = vshrl.u32 %v44, 7
  %v46 = vsub.s32 1, %v45
  %v47 = vrot.slane %v36, %v46
  %v50 = vmul.f32 %v43, %v37
  %v51 = vmul.f32 %v47, %v38
  %52 = vrot.lane.b32.xlu0 %v32, 17
  %v53 = vpop.permute.xlu0 %52
  %54 = vrot.lane.b32.xlu0 %v33, 17
  %v55 = vpop.permute.xlu0 %54
  %v56 = vlaneseq
  %v57 = vand.u32 %v56, 127
  %vm58 = vcmp.lt.s32.totalorder %v57, 17
  %v59 = vsel %vm58, %v53, %v55
  %v60 = vsel %vm58, %v55, %v53
  %v61 = vld [vmem:[%s0] sm:$0x3]
  %v62 = vsub.f32 %v32, %v60
  %v63 = vsub.f32 %v33, %v59
  %v64 = vand.u32 2147483647, %v62
  %v65 = vand.u32 2147483647, %v63
  %v67 = vlaneseq
  %v68 = vshrl.u32 %v67, 7
  %v69 = vsub.s32 0, %v68
  %v70 = vrot.slane %v61, %v69
  %v71 = vlaneseq
  %v72 = vshrl.u32 %v71, 7
  %v73 = vsub.s32 1, %v72
  %v74 = vrot.slane %v61, %v73
  %v77 = vmul.f32 %v70, %v64
  %v78 = vmul.f32 %v74, %v65
  %v79 = vadd.f32 %v50, %v77
  %v80 = vadd.f32 %v51, %v78
  %81 = vrot.lane.b32.xlu0 %v32, 16
  %v82 = vpop.permute.xlu0 %81
  %83 = vrot.lane.b32.xlu0 %v33, 16
  %v84 = vpop.permute.xlu0 %83
  %vm85 = vcmp.lt.s32.totalorder %v57, 16
  %v86 = vsel %vm85, %v82, %v84
  %v87 = vsel %vm85, %v84, %v82
  %v88 = vld [vmem:[%s1] sm:$0x3]
  %v89 = vsub.f32 %v32, %v87
  %v90 = vsub.f32 %v33, %v86
  %v91 = vand.u32 2147483647, %v89
  %v92 = vand.u32 2147483647, %v90
  %v94 = vlaneseq
  %v95 = vshrl.u32 %v94, 7
  %v96 = vsub.s32 0, %v95
  %v97 = vrot.slane %v88, %v96
  %v98 = vlaneseq
  %v99 = vshrl.u32 %v98, 7
  %v100 = vsub.s32 1, %v99
  %v101 = vrot.slane %v88, %v100
  %v104 = vmul.f32 %v97, %v91
  %v105 = vmul.f32 %v101, %v92
  %v106 = vadd.f32 %v79, %v104
  %v107 = vadd.f32 %v80, %v105
  %108 = vrot.lane.b32.xlu0 %v32, 15
  %v109 = vpop.permute.xlu0 %108
  %110 = vrot.lane.b32.xlu0 %v33, 15
  %v111 = vpop.permute.xlu0 %110
  %vm112 = vcmp.lt.s32.totalorder %v57, 15
  %v113 = vsel %vm112, %v109, %v111
  %v114 = vsel %vm112, %v111, %v109
  %v115 = vld [vmem:[%s2] sm:$0x3]
  %v116 = vsub.f32 %v32, %v114
  %v117 = vsub.f32 %v33, %v113
  %v118 = vand.u32 2147483647, %v116
  %v119 = vand.u32 2147483647, %v117
  %v121 = vlaneseq
  %v122 = vshrl.u32 %v121, 7
  %v123 = vsub.s32 0, %v122
  %v124 = vrot.slane %v115, %v123
  %v125 = vlaneseq
  %v126 = vshrl.u32 %v125, 7
  %v127 = vsub.s32 1, %v126
  %v128 = vrot.slane %v115, %v127
  %v131 = vmul.f32 %v124, %v118
  %v132 = vmul.f32 %v128, %v119
  %v133 = vadd.f32 %v106, %v131
  %v134 = vadd.f32 %v107, %v132
  %135 = vrot.lane.b32.xlu0 %v32, 127
  %v136 = vpop.permute.xlu0 %135
  %137 = vrot.lane.b32.xlu0 %v33, 127
  %v138 = vpop.permute.xlu0 %137
  %vm139 = vcmp.lt.s32.totalorder %v57, 127
  %v140 = vsel %vm139, %v136, %v138
  %v141 = vsel %vm139, %v138, %v136
  %v142 = vld [vmem:[%s3] sm:$0x3]
  %v143 = vsub.f32 %v32, %v140
  %v144 = vsub.f32 %v33, %v141
  %v145 = vand.u32 2147483647, %v143
  %v146 = vand.u32 2147483647, %v144
  %v148 = vlaneseq
  %v149 = vshrl.u32 %v148, 7
  %v150 = vsub.s32 0, %v149
  %v151 = vrot.slane %v142, %v150
  %v152 = vlaneseq
  %v153 = vshrl.u32 %v152, 7
  %v154 = vsub.s32 1, %v153
  %v155 = vrot.slane %v142, %v154
  %v158 = vmul.f32 %v151, %v145
  %v159 = vmul.f32 %v155, %v146
  %v160 = vadd.f32 %v133, %v158
  %v161 = vadd.f32 %v134, %v159
  %v162 = vadd.f32 %v160, %v161
  %163 = vadd.xlane.f32.xlu0 %v162
  %v164 = vpop.xlane.xlu0 %163
  %v165 = vrot.slane %v164, 4
  %v166 = vadd.f32 %v164, %v165
  %v167 = vrot.slane %v166, 2
  %v168 = vadd.f32 %v166, %v167
  %v169 = vrot.slane %v168, 1
  %v170 = vadd.f32 %v168, %v169
  %s171 = vtos %v170
  %v172 = vstv %s171
  %173 = vst [vmem:[%s7] sm:$0x1] %v172
  // Predicated region
  $region30: #{gloss.3} parent=0 // pred_check
    _
  $region31: #{gloss.3} parent=0 // pred_check_branch
    %175 = sbr.rel (0) target = $region33
  $region32: #{gloss.3} parent=0 // pred_region
    _
  $region33: #{gloss.3} parent=0 // pred_fallthru
    _
  // Predicated region
  $region34: #{gloss.3} parent=0 // pred_check
    _
  $region35: #{gloss.3} parent=0 // pred_check_branch
    %177 = sbr.rel (0) target = $region37
  $region36: #{gloss.3} parent=0 // pred_region
    _
  $region37: #{gloss.3} parent=0 // pred_fallthru
    _
  // Predicated region
  $region38: #{gloss.3} parent=0 // pred_check
    _
  $region39: #{gloss.3} parent=0 // pred_check_branch
    %179 = sbr.rel (0) target = $region41
  $region40: #{gloss.3} parent=0 // pred_region
    _
  $region41: #{gloss.3} parent=0 // pred_fallthru
    _
  // Predicated region
  $region42: #{gloss.3} parent=0 // pred_check
    _
  $region43: #{gloss.3} parent=0 // pred_check_branch
    %181 = sbr.rel (0) target = $region45
  $region44: #{gloss.3} parent=0 // pred_region
    _
  $region45: #{gloss.3} parent=0 // pred_fallthru
    _

// kernel: gloss.5
$region0: #{gloss.5}
  #allocation0 [shape = 'u32[]', space=smem, size = 0x4, offset = 0x4, fixed_abs, tag = 'smem constant byte address 0x4 - core index']
  #allocation1 [shape = 'u32[144,128]{1,0:T(1,128)}', space=vmem, size = 0x12000, scoped, tag = 'internal scratch']
  %s0 = inlined_call_operand.vmem [shape: f32[1,128], index: 0, kind: input, shape index: {}]
  %s1 = inlined_call_operand.vmem [shape: f32[1,128], index: 1, kind: input, shape index: {}]
  %s2 = inlined_call_operand.vmem [shape: f32[1,128], index: 2, kind: input, shape index: {}]
  %s3 = inlined_call_operand.vmem [shape: f32[1,128], index: 3, kind: input, shape index: {}]
  %s4 = inlined_call_operand.vmem [shape: f32[1,128], index: 4, kind: input, shape index: {}]
  %s5 = inlined_call_operand.vmem [shape: f32[16,128], index: 5, kind: input, shape index: {}]
  %s6 = inlined_call_operand.vmem [shape: f32[2,1,128], index: 6, kind: output, shape index: {}]
  %s7 = sld [smem:[#allocation0]]
  $region57: #{gloss.5} parent=0
    _
  %s9 = ssub.s32 1, %s7
  %s10 = scalar_select 0, %s9, %s7
  loop: start=0, step=1, limit=4
  $region2: #{gloss.5} parent=0 // loop_pre_header
    _
  $region3: #{gloss.5} parent=0 // loop_header
    %s12 = sphi 0, %s16
    %p13 = scmp.ge.s32.totalorder %s12, 4
    %s20 = sphi 0, %s20
    %s22 = sphi 0, %s20
    %s23 = sphi 0, %s22
    %s37 = sphi 0, %s23
    %s41 = sphi 0, %s41
    %s43 = sphi 0, %s41
    %s44 = sphi 0, %s43
    %s58 = sphi 0, %s44
    %s62 = sphi 0, %s62
    %s64 = sphi 0, %s62
    %s65 = sphi 0, %s64
    %s79 = sphi 0, %s65
    %s83 = sphi 0, %s83
    %s85 = sphi 0, %s83
    %s86 = sphi 0, %s85
    %s100 = sphi 0, %s86
    %s104 = sphi 0, %s104
    %s106 = sphi 0, %s104
    %s107 = sphi 0, %s106
    %s121 = sphi 0, %s107
    %s127 = sphi 0, %s129
    %s130 = sphi 0, %s127
    %s131 = sphi 0, %s130
    %s147 = sphi 0, %s131
    %s153 = sphi 0, %s155
    %s156 = sphi 0, %s153
    %s157 = sphi 0, %s156
    %s173 = sphi 0, %s157
  $region4: #{gloss.5} parent=0 // loop_header_branch
    %15 = sbr.rel (%p13) target = $region8
  $region5: #{gloss.5} parent=0 // loop_body
    %s17 = ssub.s32 %s12, 1
    %s18 = ssub.s32 %s12, 2
    %s19 = sadd.s32 %s12, 1
    %s21 = sadd.s32 %s20, 1
    %p24 = scmp.eq.s32.totalorder %s12, 1
    %p25 = scmp.ne.s32.totalorder %s20, %s22
    %p26 = scmp.eq.s32.totalorder %s12, 0
    %p27 = por %p25, %p26
    %p28 = scmp.ne.s32.totalorder %s20, %s22
    %p29 = scmp.eq.s32.totalorder %s17, 1
    %p30 = por %p28, %p29
    %p31 = scmp.ne.s32.totalorder %s22, %s23
    %p32 = scmp.eq.s32.totalorder %s17, 0
    %p33 = por %p31, %p32
    %p34 = scmp.ne.s32.totalorder %s22, %s23
    %p35 = scmp.eq.s32.totalorder %s18, 1
    %p36 = por %p34, %p35
    %p38 = scmp.ne.s32.totalorder %s23, %s37
    %p39 = scmp.eq.s32.totalorder %s18, 0
    %p40 = por %p38, %p39
    %s42 = sadd.s32 %s41, 1
    %p45 = scmp.eq.s32.totalorder %s12, 1
    %p46 = scmp.ne.s32.totalorder %s41, %s43
    %p47 = scmp.eq.s32.totalorder %s12, 0
    %p48 = por %p46, %p47
    %p49 = scmp.ne.s32.totalorder %s41, %s43
    %p50 = scmp.eq.s32.totalorder %s17, 1
    %p51 = por %p49, %p50
    %p52 = scmp.ne.s32.totalorder %s43, %s44
    %p53 = scmp.eq.s32.totalorder %s17, 0
    %p54 = por %p52, %p53
    %p55 = scmp.ne.s32.totalorder %s43, %s44
    %p56 = scmp.eq.s32.totalorder %s18, 1
    %p57 = por %p55, %p56
    %p59 = scmp.ne.s32.totalorder %s44, %s58
    %p60 = scmp.eq.s32.totalorder %s18, 0
    %p61 = por %p59, %p60
    %s63 = sadd.s32 %s62, 1
    %p66 = scmp.eq.s32.totalorder %s12, 1
    %p67 = scmp.ne.s32.totalorder %s62, %s64
    %p68 = scmp.eq.s32.totalorder %s12, 0
    %p69 = por %p67, %p68
    %p70 = scmp.ne.s32.totalorder %s62, %s64
    %p71 = scmp.eq.s32.totalorder %s17, 1
    %p72 = por %p70, %p71
    %p73 = scmp.ne.s32.totalorder %s64, %s65
    %p74 = scmp.eq.s32.totalorder %s17, 0
    %p75 = por %p73, %p74
    %p76 = scmp.ne.s32.totalorder %s64, %s65
    %p77 = scmp.eq.s32.totalorder %s18, 1
    %p78 = por %p76, %p77
    %p80 = scmp.ne.s32.totalorder %s65, %s79
    %p81 = scmp.eq.s32.totalorder %s18, 0
    %p82 = por %p80, %p81
    %s84 = sadd.s32 %s83, 1
    %p87 = scmp.eq.s32.totalorder %s12, 1
    %p88 = scmp.ne.s32.totalorder %s83, %s85
    %p89 = scmp.eq.s32.totalorder %s12, 0
    %p90 = por %p88, %p89
    %p91 = scmp.ne.s32.totalorder %s83, %s85
    %p92 = scmp.eq.s32.totalorder %s17, 1
    %p93 = por %p91, %p92
    %p94 = scmp.ne.s32.totalorder %s85, %s86
    %p95 = scmp.eq.s32.totalorder %s17, 0
    %p96 = por %p94, %p95
    %p97 = scmp.ne.s32.totalorder %s85, %s86
    %p98 = scmp.eq.s32.totalorder %s18, 1
    %p99 = por %p97, %p98
    %p101 = scmp.ne.s32.totalorder %s86, %s100
    %p102 = scmp.eq.s32.totalorder %s18, 0
    %p103 = por %p101, %p102
    %s105 = sadd.s32 %s104, 1
    %p108 = scmp.eq.s32.totalorder %s12, 1
    %p109 = scmp.ne.s32.totalorder %s104, %s106
    %p110 = scmp.eq.s32.totalorder %s12, 0
    %p111 = por %p109, %p110
    %p112 = scmp.ne.s32.totalorder %s104, %s106
    %p113 = scmp.eq.s32.totalorder %s17, 1
    %p114 = por %p112, %p113
    %p115 = scmp.ne.s32.totalorder %s106, %s107
    %p116 = scmp.eq.s32.totalorder %s17, 0
    %p117 = por %p115, %p116
    %p118 = scmp.ne.s32.totalorder %s106, %s107
    %p119 = scmp.eq.s32.totalorder %s18, 1
    %p120 = por %p118, %p119
    %p122 = scmp.ne.s32.totalorder %s107, %s121
    %p123 = scmp.eq.s32.totalorder %s18, 0
    %p124 = por %p122, %p123
    %s125 = ssub.s32 %s12, %s19
    %p126 = scmp.eq.s32.totalorder %s125, 0
    %s128 = sadd.s32 %s127, 1
    %s129 = scalar_select %p126, %s127, %s128
    %p132 = pneg %p126
    %p133 = scmp.eq.s32.totalorder %s12, 1
    %p134 = por %p132, %p133
    %p135 = scmp.ne.s32.totalorder %s127, %s130
    %p136 = scmp.eq.s32.totalorder %s12, 0
    %p137 = por %p135, %p136
    %p138 = scmp.ne.s32.totalorder %s127, %s130
    %p139 = scmp.eq.s32.totalorder %s17, 1
    %p140 = por %p138, %p139
    %p141 = scmp.ne.s32.totalorder %s130, %s131
    %p142 = scmp.eq.s32.totalorder %s17, 0
    %p143 = por %p141, %p142
    %p144 = scmp.ne.s32.totalorder %s130, %s131
    %p145 = scmp.eq.s32.totalorder %s18, 1
    %p146 = por %p144, %p145
    %p148 = scmp.ne.s32.totalorder %s131, %s147
    %p149 = scmp.eq.s32.totalorder %s18, 0
    %p150 = por %p148, %p149
    %s151 = ssub.s32 %s12, %s19
    %p152 = scmp.eq.s32.totalorder %s151, 0
    %s154 = sadd.s32 %s153, 1
    %s155 = scalar_select %p152, %s153, %s154
    %p158 = pneg %p152
    %p159 = scmp.eq.s32.totalorder %s12, 1
    %p160 = por %p158, %p159
    %p161 = scmp.ne.s32.totalorder %s153, %s156
    %p162 = scmp.eq.s32.totalorder %s12, 0
    %p163 = por %p161, %p162
    %p164 = scmp.ne.s32.totalorder %s153, %s156
    %p165 = scmp.eq.s32.totalorder %s17, 1
    %p166 = por %p164, %p165
    %p167 = scmp.ne.s32.totalorder %s156, %s157
    %p168 = scmp.eq.s32.totalorder %s17, 0
    %p169 = por %p167, %p168
    %p170 = scmp.ne.s32.totalorder %s156, %s157
    %p171 = scmp.eq.s32.totalorder %s18, 1
    %p172 = por %p170, %p171
    %p174 = scmp.ne.s32.totalorder %s157, %s173
    %p175 = scmp.eq.s32.totalorder %s18, 0
    %p176 = por %p174, %p175
    %p177 = scmp.le.s32.totalorder 1, %s12
    %p178 = scmp.lt.s32.totalorder %s12, 3
    %p179 = pnand %p177, %p178
    %p180 = pneg %p179
    // Predicated region
    $region9: #{gloss.5} parent=5 // pred_check
      _
    $region10: #{gloss.5} parent=5 // pred_check_branch
      %182 = sbr.rel (%p179) target = $region12
    $region11: #{gloss.5} parent=5 // pred_region
      %s183 = ssub.s32 %s12, 1
      // Predicated region
      $region13: #{gloss.5} parent=11 // pred_check
        %p184 = pneg %p33
      $region14: #{gloss.5} parent=11 // pred_check_branch
        %186 = sbr.rel (%p184) target = $region16
      $region15: #{gloss.5} parent=11 // pred_region
        _
      $region16: #{gloss.5} parent=11 // pred_fallthru
        _
      // Predicated region
      $region17: #{gloss.5} parent=11 // pred_check
        %p187 = pneg %p54
      $region18: #{gloss.5} parent=11 // pred_check_branch
        %189 = sbr.rel (%p187) target = $region20
      $region19: #{gloss.5} parent=11 // pred_region
        _
      $region20: #{gloss.5} parent=11 // pred_fallthru
        _
      // Predicated region
      $region21: #{gloss.5} parent=11 // pred_check
        %p190 = pneg %p75
      $region22: #{gloss.5} parent=11 // pred_check_branch
        %192 = sbr.rel (%p190) target = $region24
      $region23: #{gloss.5} parent=11 // pred_region
        _
      $region24: #{gloss.5} parent=11 // pred_fallthru
        _
      // Predicated region
      $region25: #{gloss.5} parent=11 // pred_check
        %p193 = pneg %p96
      $region26: #{gloss.5} parent=11 // pred_check_branch
        %195 = sbr.rel (%p193) target = $region28
      $region27: #{gloss.5} parent=11 // pred_region
        _
      $region28: #{gloss.5} parent=11 // pred_fallthru
        _
      // Predicated region
      $region29: #{gloss.5} parent=11 // pred_check
        %p196 = pneg %p117
      $region30: #{gloss.5} parent=11 // pred_check_branch
        %198 = sbr.rel (%p196) target = $region32
      $region31: #{gloss.5} parent=11 // pred_region
        _
      $region32: #{gloss.5} parent=11 // pred_fallthru
        _
    $region12: #{gloss.5} parent=5 // pred_fallthru
      _
    %p199 = scmp.lt.s32.totalorder %s12, 2
    // Predicated region
    $region33: #{gloss.5} parent=5 // pred_check
      %p200 = pneg %p199
    $region34: #{gloss.5} parent=5 // pred_check_branch
      %202 = sbr.rel (%p200) target = $region36
    $region35: #{gloss.5} parent=5 // pred_region
      // Predicated region
      $region37: #{gloss.5} parent=35 // pred_check
        %p203 = pneg %p137
      $region38: #{gloss.5} parent=35 // pred_check_branch
        %205 = sbr.rel (%p203) target = $region40
      $region39: #{gloss.5} parent=35 // pred_region
        %p206 = scmp.lt.s32.totalorder %s12, 1
        %s207 = scalar_select %p206, %s12, 1
        %s208 = smul.addr %s207, 8
        %s209 = scalar_lea.vmem %s5, %s208
      $region40: #{gloss.5} parent=35 // pred_fallthru
        _
    $region36: #{gloss.5} parent=5 // pred_fallthru
      _
    %p210 = scmp.le.s32.totalorder 1, %s12
    %p211 = scmp.lt.s32.totalorder %s12, 3
    %p212 = pnand %p210, %p211
    %p213 = pneg %p212
    // Predicated region
    $region41: #{gloss.5} parent=5 // pred_check
      _
    $region42: #{gloss.5} parent=5 // pred_check_branch
      %215 = sbr.rel (%p212) target = $region44
    $region43: #{gloss.5} parent=5 // pred_region
      %s216 = ssub.s32 %s12, 1
      %p217 = pneg %p33
      %p218 = pneg %p30
      %p219 = pneg %p54
      %p220 = pneg %p51
      %p221 = pneg %p75
      %p222 = pneg %p72
      %p223 = pneg %p96
      %p224 = pneg %p93
      %p225 = pneg %p117
      %p226 = pneg %p114
      %p227 = scmp.lt.s32.totalorder %s17, 1
      %s228 = scalar_select %p227, %s17, 1
      %s229 = smul.addr %s228, 8
      %s230 = scalar_lea.vmem %s5, %s229
      %p231 = pneg %p143
      %p232 = pneg %p140
      %p233 = pneg %p169
      %p234 = pneg %p166
      %p235 = scmp.lt.s32.totalorder %s17, 1
      %s236 = scalar_select %p235, %s17, 1
      %s237 = scalar_lea.vmem %s6, %s236
      %p238 = scmp.lt.s32.totalorder %s17, 1
      %s239 = scalar_select %p238, %s17, 1
      %s240 = smul.addr %s239, 8
      %s241 = scalar_lea.vmem %s5, %s240
      %p242 = scmp.lt.s32.totalorder %s17, 1
      %s243 = scalar_select %p242, %s17, 1
      %s244 = scalar_lea.vmem %s6, %s243
      %v245 = vld [vmem:[%s241] sm:$0xff]
      %v246 = vld [vmem:[%s4] sm:$0x1]
      %v247 = vand.u32 2147483647, %v245
      %v249 = vlaneseq
      %v250 = vshrl.u32 %v249, 7
      %v251 = vsub.s32 0, %v250
      %v252 = vrot.slane %v246, %v251
      %v254 = vmul.f32 %v252, %v247
      %255 = vrot.lane.b32.xlu0 %v245, 5
      %v256 = vpop.permute.xlu0 %255
      %v257 = vld [vmem:[%s0] sm:$0x1]
      %v258 = vsub.f32 %v245, %v256
      %v259 = vand.u32 2147483647, %v258
      %v261 = vlaneseq
      %v262 = vshrl.u32 %v261, 7
      %v263 = vsub.s32 0, %v262
      %v264 = vrot.slane %v257, %v263
      %v266 = vmul.f32 %v264, %v259
      %v267 = vadd.f32 %v254, %v266
      %268 = vrot.lane.b32.xlu0 %v245, 4
      %v269 = vpop.permute.xlu0 %268
      %v270 = vld [vmem:[%s1] sm:$0x1]
      %v271 = vsub.f32 %v245, %v269
      %v272 = vand.u32 2147483647, %v271
      %v274 = vlaneseq
      %v275 = vshrl.u32 %v274, 7
      %v276 = vsub.s32 0, %v275
      %v277 = vrot.slane %v270, %v276
      %v279 = vmul.f32 %v277, %v272
      %v280 = vadd.f32 %v267, %v279
      %281 = vrot.lane.b32.xlu0 %v245, 3
      %v282 = vpop.permute.xlu0 %281
      %v283 = vld [vmem:[%s2] sm:$0x1]
      %v284 = vsub.f32 %v245, %v282
      %v285 = vand.u32 2147483647, %v284
      %v287 = vlaneseq
      %v288 = vshrl.u32 %v287, 7
      %v289 = vsub.s32 0, %v288
      %v290 = vrot.slane %v283, %v289
      %v292 = vmul.f32 %v290, %v285
      %v293 = vadd.f32 %v280, %v292
      %294 = vrot.lane.b32.xlu0 %v245, 127
      %v295 = vpop.permute.xlu0 %294
      %v296 = vld [vmem:[%s3] sm:$0x1]
      %v297 = vsub.f32 %v245, %v295
      %v298 = vand.u32 2147483647, %v297
      %v300 = vlaneseq
      %v301 = vshrl.u32 %v300, 7
      %v302 = vsub.s32 0, %v301
      %v303 = vrot.slane %v296, %v302
      %v305 = vmul.f32 %v303, %v298
      %v306 = vadd.f32 %v293, %v305
      %307 = vadd.xlane.f32.xlu0 %v306
      %v308 = vpop.xlane.xlu0 %307
      %v309 = vrot.slane %v308, 4
      %v310 = vadd.f32 %v308, %v309
      %v311 = vrot.slane %v310, 2
      %v312 = vadd.f32 %v310, %v311
      %v313 = vrot.slane %v312, 1
      %v314 = vadd.f32 %v312, %v313
      %s315 = vtos %v314
      %v316 = vstv %s315
      %317 = vst [vmem:[%s244] sm:$0x1] %v316
      %p318 = scmp.lt.s32.totalorder %s17, 1
      %s319 = scalar_select %p318, %s17, 1
      %s320 = scalar_lea.vmem %s6, %s319
      // Predicated region
      $region45: #{gloss.5} parent=43 // pred_check
        %p321 = pneg %p166
      $region46: #{gloss.5} parent=43 // pred_check_branch
        %323 = sbr.rel (%p321) target = $region48
      $region47: #{gloss.5} parent=43 // pred_region
        _
      $region48: #{gloss.5} parent=43 // pred_fallthru
        _
    $region44: #{gloss.5} parent=5 // pred_fallthru
      _
    %p324 = scmp.le.s32.totalorder 2, %s12
    // Predicated region
    $region49: #{gloss.5} parent=5 // pred_check
      %p325 = pneg %p324
    $region50: #{gloss.5} parent=5 // pred_check_branch
      %327 = sbr.rel (%p325) target = $region52
    $region51: #{gloss.5} parent=5 // pred_region
      %s328 = ssub.s32 %s12, 2
      // Predicated region
      $region53: #{gloss.5} parent=51 // pred_check
        %p329 = pneg %p172
      $region54: #{gloss.5} parent=51 // pred_check_branch
        %331 = sbr.rel (%p329) target = $region56
      $region55: #{gloss.5} parent=51 // pred_region
        %p332 = scmp.lt.s32.totalorder %s18, 1
        %s333 = scalar_select %p332, %s18, 1
        %s334 = scalar_lea.vmem %s6, %s333
      $region56: #{gloss.5} parent=51 // pred_fallthru
        _
    $region52: #{gloss.5} parent=5 // pred_fallthru
      _
  $region6: #{gloss.5} parent=0 // loop_footer
    %s16 = sadd.s32 1, %s12
  $region7: #{gloss.5} parent=0 // loop_footer_branch
    %11 = sbr.rel target = $region3
  $region8: #{gloss.5} parent=0 // loop_exit
    _

// kernel: gloss.4
$region0: #{gloss.4}
  #allocation0 [shape = 'u32[]', space=smem, size = 0x4, offset = 0x4, fixed_abs, tag = 'smem constant byte address 0x4 - core index']
  #allocation1 [shape = 'u32[144,128]{1,0:T(1,128)}', space=vmem, size = 0x12000, scoped, tag = 'internal scratch']
  %s0 = inlined_call_operand.vmem [shape: f32[1,128], index: 0, kind: input, shape index: {}]
  %s1 = inlined_call_operand.vmem [shape: f32[1,128], index: 1, kind: input, shape index: {}]
  %s2 = inlined_call_operand.vmem [shape: f32[1,128], index: 2, kind: input, shape index: {}]
  %s3 = inlined_call_operand.vmem [shape: f32[1,128], index: 3, kind: input, shape index: {}]
  %s4 = inlined_call_operand.vmem [shape: f32[1,128], index: 4, kind: input, shape index: {}]
  %s5 = inlined_call_operand.vmem [shape: f32[16,128], index: 5, kind: input, shape index: {}]
  %s6 = inlined_call_operand.vmem [shape: f32[2,1,128], index: 6, kind: output, shape index: {}]
  %s7 = sld [smem:[#allocation0]]
  $region57: #{gloss.4} parent=0
    _
  %s9 = ssub.s32 1, %s7
  %s10 = scalar_select 0, %s9, %s7
  loop: start=0, step=1, limit=4
  $region2: #{gloss.4} parent=0 // loop_pre_header
    _
  $region3: #{gloss.4} parent=0 // loop_header
    %s12 = sphi 0, %s16
    %p13 = scmp.ge.s32.totalorder %s12, 4
    %s20 = sphi 0, %s20
    %s22 = sphi 0, %s20
    %s23 = sphi 0, %s22
    %s37 = sphi 0, %s23
    %s41 = sphi 0, %s41
    %s43 = sphi 0, %s41
    %s44 = sphi 0, %s43
    %s58 = sphi 0, %s44
    %s62 = sphi 0, %s62
    %s64 = sphi 0, %s62
    %s65 = sphi 0, %s64
    %s79 = sphi 0, %s65
    %s83 = sphi 0, %s83
    %s85 = sphi 0, %s83
    %s86 = sphi 0, %s85
    %s100 = sphi 0, %s86
    %s104 = sphi 0, %s104
    %s106 = sphi 0, %s104
    %s107 = sphi 0, %s106
    %s121 = sphi 0, %s107
    %s127 = sphi 0, %s129
    %s130 = sphi 0, %s127
    %s131 = sphi 0, %s130
    %s147 = sphi 0, %s131
    %s153 = sphi 0, %s155
    %s156 = sphi 0, %s153
    %s157 = sphi 0, %s156
    %s173 = sphi 0, %s157
  $region4: #{gloss.4} parent=0 // loop_header_branch
    %15 = sbr.rel (%p13) target = $region8
  $region5: #{gloss.4} parent=0 // loop_body
    %s17 = ssub.s32 %s12, 1
    %s18 = ssub.s32 %s12, 2
    %s19 = sadd.s32 %s12, 1
    %s21 = sadd.s32 %s20, 1
    %p24 = scmp.eq.s32.totalorder %s12, 1
    %p25 = scmp.ne.s32.totalorder %s20, %s22
    %p26 = scmp.eq.s32.totalorder %s12, 0
    %p27 = por %p25, %p26
    %p28 = scmp.ne.s32.totalorder %s20, %s22
    %p29 = scmp.eq.s32.totalorder %s17, 1
    %p30 = por %p28, %p29
    %p31 = scmp.ne.s32.totalorder %s22, %s23
    %p32 = scmp.eq.s32.totalorder %s17, 0
    %p33 = por %p31, %p32
    %p34 = scmp.ne.s32.totalorder %s22, %s23
    %p35 = scmp.eq.s32.totalorder %s18, 1
    %p36 = por %p34, %p35
    %p38 = scmp.ne.s32.totalorder %s23, %s37
    %p39 = scmp.eq.s32.totalorder %s18, 0
    %p40 = por %p38, %p39
    %s42 = sadd.s32 %s41, 1
    %p45 = scmp.eq.s32.totalorder %s12, 1
    %p46 = scmp.ne.s32.totalorder %s41, %s43
    %p47 = scmp.eq.s32.totalorder %s12, 0
    %p48 = por %p46, %p47
    %p49 = scmp.ne.s32.totalorder %s41, %s43
    %p50 = scmp.eq.s32.totalorder %s17, 1
    %p51 = por %p49, %p50
    %p52 = scmp.ne.s32.totalorder %s43, %s44
    %p53 = scmp.eq.s32.totalorder %s17, 0
    %p54 = por %p52, %p53
    %p55 = scmp.ne.s32.totalorder %s43, %s44
    %p56 = scmp.eq.s32.totalorder %s18, 1
    %p57 = por %p55, %p56
    %p59 = scmp.ne.s32.totalorder %s44, %s58
    %p60 = scmp.eq.s32.totalorder %s18, 0
    %p61 = por %p59, %p60
    %s63 = sadd.s32 %s62, 1
    %p66 = scmp.eq.s32.totalorder %s12, 1
    %p67 = scmp.ne.s32.totalorder %s62, %s64
    %p68 = scmp.eq.s32.totalorder %s12, 0
    %p69 = por %p67, %p68
    %p70 = scmp.ne.s32.totalorder %s62, %s64
    %p71 = scmp.eq.s32.totalorder %s17, 1
    %p72 = por %p70, %p71
    %p73 = scmp.ne.s32.totalorder %s64, %s65
    %p74 = scmp.eq.s32.totalorder %s17, 0
    %p75 = por %p73, %p74
    %p76 = scmp.ne.s32.totalorder %s64, %s65
    %p77 = scmp.eq.s32.totalorder %s18, 1
    %p78 = por %p76, %p77
    %p80 = scmp.ne.s32.totalorder %s65, %s79
    %p81 = scmp.eq.s32.totalorder %s18, 0
    %p82 = por %p80, %p81
    %s84 = sadd.s32 %s83, 1
    %p87 = scmp.eq.s32.totalorder %s12, 1
    %p88 = scmp.ne.s32.totalorder %s83, %s85
    %p89 = scmp.eq.s32.totalorder %s12, 0
    %p90 = por %p88, %p89
    %p91 = scmp.ne.s32.totalorder %s83, %s85
    %p92 = scmp.eq.s32.totalorder %s17, 1
    %p93 = por %p91, %p92
    %p94 = scmp.ne.s32.totalorder %s85, %s86
    %p95 = scmp.eq.s32.totalorder %s17, 0
    %p96 = por %p94, %p95
    %p97 = scmp.ne.s32.totalorder %s85, %s86
    %p98 = scmp.eq.s32.totalorder %s18, 1
    %p99 = por %p97, %p98
    %p101 = scmp.ne.s32.totalorder %s86, %s100
    %p102 = scmp.eq.s32.totalorder %s18, 0
    %p103 = por %p101, %p102
    %s105 = sadd.s32 %s104, 1
    %p108 = scmp.eq.s32.totalorder %s12, 1
    %p109 = scmp.ne.s32.totalorder %s104, %s106
    %p110 = scmp.eq.s32.totalorder %s12, 0
    %p111 = por %p109, %p110
    %p112 = scmp.ne.s32.totalorder %s104, %s106
    %p113 = scmp.eq.s32.totalorder %s17, 1
    %p114 = por %p112, %p113
    %p115 = scmp.ne.s32.totalorder %s106, %s107
    %p116 = scmp.eq.s32.totalorder %s17, 0
    %p117 = por %p115, %p116
    %p118 = scmp.ne.s32.totalorder %s106, %s107
    %p119 = scmp.eq.s32.totalorder %s18, 1
    %p120 = por %p118, %p119
    %p122 = scmp.ne.s32.totalorder %s107, %s121
    %p123 = scmp.eq.s32.totalorder %s18, 0
    %p124 = por %p122, %p123
    %s125 = ssub.s32 %s12, %s19
    %p126 = scmp.eq.s32.totalorder %s125, 0
    %s128 = sadd.s32 %s127, 1
    %s129 = scalar_select %p126, %s127, %s128
    %p132 = pneg %p126
    %p133 = scmp.eq.s32.totalorder %s12, 1
    %p134 = por %p132, %p133
    %p135 = scmp.ne.s32.totalorder %s127, %s130
    %p136 = scmp.eq.s32.totalorder %s12, 0
    %p137 = por %p135, %p136
    %p138 = scmp.ne.s32.totalorder %s127, %s130
    %p139 = scmp.eq.s32.totalorder %s17, 1
    %p140 = por %p138, %p139
    %p141 = scmp.ne.s32.totalorder %s130, %s131
    %p142 = scmp.eq.s32.totalorder %s17, 0
    %p143 = por %p141, %p142
    %p144 = scmp.ne.s32.totalorder %s130, %s131
    %p145 = scmp.eq.s32.totalorder %s18, 1
    %p146 = por %p144, %p145
    %p148 = scmp.ne.s32.totalorder %s131, %s147
    %p149 = scmp.eq.s32.totalorder %s18, 0
    %p150 = por %p148, %p149
    %s151 = ssub.s32 %s12, %s19
    %p152 = scmp.eq.s32.totalorder %s151, 0
    %s154 = sadd.s32 %s153, 1
    %s155 = scalar_select %p152, %s153, %s154
    %p158 = pneg %p152
    %p159 = scmp.eq.s32.totalorder %s12, 1
    %p160 = por %p158, %p159
    %p161 = scmp.ne.s32.totalorder %s153, %s156
    %p162 = scmp.eq.s32.totalorder %s12, 0
    %p163 = por %p161, %p162
    %p164 = scmp.ne.s32.totalorder %s153, %s156
    %p165 = scmp.eq.s32.totalorder %s17, 1
    %p166 = por %p164, %p165
    %p167 = scmp.ne.s32.totalorder %s156, %s157
    %p168 = scmp.eq.s32.totalorder %s17, 0
    %p169 = por %p167, %p168
    %p170 = scmp.ne.s32.totalorder %s156, %s157
    %p171 = scmp.eq.s32.totalorder %s18, 1
    %p172 = por %p170, %p171
    %p174 = scmp.ne.s32.totalorder %s157, %s173
    %p175 = scmp.eq.s32.totalorder %s18, 0
    %p176 = por %p174, %p175
    %p177 = scmp.le.s32.totalorder 1, %s12
    %p178 = scmp.lt.s32.totalorder %s12, 3
    %p179 = pnand %p177, %p178
    %p180 = pneg %p179
    // Predicated region
    $region9: #{gloss.4} parent=5 // pred_check
      _
    $region10: #{gloss.4} parent=5 // pred_check_branch
      %182 = sbr.rel (%p179) target = $region12
    $region11: #{gloss.4} parent=5 // pred_region
      %s183 = ssub.s32 %s12, 1
      // Predicated region
      $region13: #{gloss.4} parent=11 // pred_check
        %p184 = pneg %p33
      $region14: #{gloss.4} parent=11 // pred_check_branch
        %186 = sbr.rel (%p184) target = $region16
      $region15: #{gloss.4} parent=11 // pred_region
        _
      $region16: #{gloss.4} parent=11 // pred_fallthru
        _
      // Predicated region
      $region17: #{gloss.4} parent=11 // pred_check
        %p187 = pneg %p54
      $region18: #{gloss.4} parent=11 // pred_check_branch
        %189 = sbr.rel (%p187) target = $region20
      $region19: #{gloss.4} parent=11 // pred_region
        _
      $region20: #{gloss.4} parent=11 // pred_fallthru
        _
      // Predicated region
      $region21: #{gloss.4} parent=11 // pred_check
        %p190 = pneg %p75
      $region22: #{gloss.4} parent=11 // pred_check_branch
        %192 = sbr.rel (%p190) target = $region24
      $region23: #{gloss.4} parent=11 // pred_region
        _
      $region24: #{gloss.4} parent=11 // pred_fallthru
        _
      // Predicated region
      $region25: #{gloss.4} parent=11 // pred_check
        %p193 = pneg %p96
      $region26: #{gloss.4} parent=11 // pred_check_branch
        %195 = sbr.rel (%p193) target = $region28
      $region27: #{gloss.4} parent=11 // pred_region
        _
      $region28: #{gloss.4} parent=11 // pred_fallthru
        _
      // Predicated region
      $region29: #{gloss.4} parent=11 // pred_check
        %p196 = pneg %p117
      $region30: #{gloss.4} parent=11 // pred_check_branch
        %198 = sbr.rel (%p196) target = $region32
      $region31: #{gloss.4} parent=11 // pred_region
        _
      $region32: #{gloss.4} parent=11 // pred_fallthru
        _
    $region12: #{gloss.4} parent=5 // pred_fallthru
      _
    %p199 = scmp.lt.s32.totalorder %s12, 2
    // Predicated region
    $region33: #{gloss.4} parent=5 // pred_check
      %p200 = pneg %p199
    $region34: #{gloss.4} parent=5 // pred_check_branch
      %202 = sbr.rel (%p200) target = $region36
    $region35: #{gloss.4} parent=5 // pred_region
      // Predicated region
      $region37: #{gloss.4} parent=35 // pred_check
        %p203 = pneg %p137
      $region38: #{gloss.4} parent=35 // pred_check_branch
        %205 = sbr.rel (%p203) target = $region40
      $region39: #{gloss.4} parent=35 // pred_region
        %p206 = scmp.lt.s32.totalorder %s12, 1
        %s207 = scalar_select %p206, %s12, 1
        %s208 = smul.addr %s207, 8
        %s209 = scalar_lea.vmem %s5, %s208
      $region40: #{gloss.4} parent=35 // pred_fallthru
        _
    $region36: #{gloss.4} parent=5 // pred_fallthru
      _
    %p210 = scmp.le.s32.totalorder 1, %s12
    %p211 = scmp.lt.s32.totalorder %s12, 3
    %p212 = pnand %p210, %p211
    %p213 = pneg %p212
    // Predicated region
    $region41: #{gloss.4} parent=5 // pred_check
      _
    $region42: #{gloss.4} parent=5 // pred_check_branch
      %215 = sbr.rel (%p212) target = $region44
    $region43: #{gloss.4} parent=5 // pred_region
      %s216 = ssub.s32 %s12, 1
      %p217 = pneg %p33
      %p218 = pneg %p30
      %p219 = pneg %p54
      %p220 = pneg %p51
      %p221 = pneg %p75
      %p222 = pneg %p72
      %p223 = pneg %p96
      %p224 = pneg %p93
      %p225 = pneg %p117
      %p226 = pneg %p114
      %p227 = scmp.lt.s32.totalorder %s17, 1
      %s228 = scalar_select %p227, %s17, 1
      %s229 = smul.addr %s228, 8
      %s230 = scalar_lea.vmem %s5, %s229
      %p231 = pneg %p143
      %p232 = pneg %p140
      %p233 = pneg %p169
      %p234 = pneg %p166
      %p235 = scmp.lt.s32.totalorder %s17, 1
      %s236 = scalar_select %p235, %s17, 1
      %s237 = scalar_lea.vmem %s6, %s236
      %p238 = scmp.lt.s32.totalorder %s17, 1
      %s239 = scalar_select %p238, %s17, 1
      %s240 = smul.addr %s239, 8
      %s241 = scalar_lea.vmem %s5, %s240
      %p242 = scmp.lt.s32.totalorder %s17, 1
      %s243 = scalar_select %p242, %s17, 1
      %s244 = scalar_lea.vmem %s6, %s243
      %v245 = vld [vmem:[%s241] sm:$0xff]
      %v246 = vld [vmem:[%s4] sm:$0x1]
      %v247 = vand.u32 2147483647, %v245
      %v249 = vlaneseq
      %v250 = vshrl.u32 %v249, 7
      %v251 = vsub.s32 0, %v250
      %v252 = vrot.slane %v246, %v251
      %v254 = vmul.f32 %v252, %v247
      %255 = vrot.lane.b32.xlu0 %v245, 9
      %v256 = vpop.permute.xlu0 %255
      %v257 = vld [vmem:[%s0] sm:$0x1]
      %v258 = vsub.f32 %v245, %v256
      %v259 = vand.u32 2147483647, %v258
      %v261 = vlaneseq
      %v262 = vshrl.u32 %v261, 7
      %v263 = vsub.s32 0, %v262
      %v264 = vrot.slane %v257, %v263
      %v266 = vmul.f32 %v264, %v259
      %v267 = vadd.f32 %v254, %v266
      %268 = vrot.lane.b32.xlu0 %v245, 8
      %v269 = vpop.permute.xlu0 %268
      %v270 = vld [vmem:[%s1] sm:$0x1]
      %v271 = vsub.f32 %v245, %v269
      %v272 = vand.u32 2147483647, %v271
      %v274 = vlaneseq
      %v275 = vshrl.u32 %v274, 7
      %v276 = vsub.s32 0, %v275
      %v277 = vrot.slane %v270, %v276
      %v279 = vmul.f32 %v277, %v272
      %v280 = vadd.f32 %v267, %v279
      %281 = vrot.lane.b32.xlu0 %v245, 7
      %v282 = vpop.permute.xlu0 %281
      %v283 = vld [vmem:[%s2] sm:$0x1]
      %v284 = vsub.f32 %v245, %v282
      %v285 = vand.u32 2147483647, %v284
      %v287 = vlaneseq
      %v288 = vshrl.u32 %v287, 7
      %v289 = vsub.s32 0, %v288
      %v290 = vrot.slane %v283, %v289
      %v292 = vmul.f32 %v290, %v285
      %v293 = vadd.f32 %v280, %v292
      %294 = vrot.lane.b32.xlu0 %v245, 127
      %v295 = vpop.permute.xlu0 %294
      %v296 = vld [vmem:[%s3] sm:$0x1]
      %v297 = vsub.f32 %v245, %v295
      %v298 = vand.u32 2147483647, %v297
      %v300 = vlaneseq
      %v301 = vshrl.u32 %v300, 7
      %v302 = vsub.s32 0, %v301
      %v303 = vrot.slane %v296, %v302
      %v305 = vmul.f32 %v303, %v298
      %v306 = vadd.f32 %v293, %v305
      %307 = vadd.xlane.f32.xlu0 %v306
      %v308 = vpop.xlane.xlu0 %307
      %v309 = vrot.slane %v308, 4
      %v310 = vadd.f32 %v308, %v309
      %v311 = vrot.slane %v310, 2
      %v312 = vadd.f32 %v310, %v311
      %v313 = vrot.slane %v312, 1
      %v314 = vadd.f32 %v312, %v313
      %s315 = vtos %v314
      %v316 = vstv %s315
      %317 = vst [vmem:[%s244] sm:$0x1] %v316
      %p318 = scmp.lt.s32.totalorder %s17, 1
      %s319 = scalar_select %p318, %s17, 1
      %s320 = scalar_lea.vmem %s6, %s319
      // Predicated region
      $region45: #{gloss.4} parent=43 // pred_check
        %p321 = pneg %p166
      $region46: #{gloss.4} parent=43 // pred_check_branch
        %323 = sbr.rel (%p321) target = $region48
      $region47: #{gloss.4} parent=43 // pred_region
        _
      $region48: #{gloss.4} parent=43 // pred_fallthru
        _
    $region44: #{gloss.4} parent=5 // pred_fallthru
      _
    %p324 = scmp.le.s32.totalorder 2, %s12
    // Predicated region
    $region49: #{gloss.4} parent=5 // pred_check
      %p325 = pneg %p324
    $region50: #{gloss.4} parent=5 // pred_check_branch
      %327 = sbr.rel (%p325) target = $region52
    $region51: #{gloss.4} parent=5 // pred_region
      %s328 = ssub.s32 %s12, 2
      // Predicated region
      $region53: #{gloss.4} parent=51 // pred_check
        %p329 = pneg %p172
      $region54: #{gloss.4} parent=51 // pred_check_branch
        %331 = sbr.rel (%p329) target = $region56
      $region55: #{gloss.4} parent=51 // pred_region
        %p332 = scmp.lt.s32.totalorder %s18, 1
        %s333 = scalar_select %p332, %s18, 1
        %s334 = scalar_lea.vmem %s6, %s333
      $region56: #{gloss.4} parent=51 // pred_fallthru
        _
    $region52: #{gloss.4} parent=5 // pred_fallthru
      _
  $region6: #{gloss.4} parent=0 // loop_footer
    %s16 = sadd.s32 1, %s12
  $region7: #{gloss.4} parent=0 // loop_footer_branch
    %11 = sbr.rel target = $region3
  $region8: #{gloss.4} parent=0 // loop_exit
    _

</llo_original>
